<compile_context>
chip_gen: v7x
topology: tpu7x:2x2x1
jax: 0.10.0
libtpu: 0.0.40
codegen_flags: <defaults>
</compile_context>

<pallas_src>
import functools

import jax
import jax.numpy as jnp
from jax.experimental import pallas as pl
from jax.experimental.pallas import tpu as pltpu


# ----------------------------------------------------------------------------
# Pallas kernel: one batch tile of the CNF dynamics, batch on the lane axis.
# ----------------------------------------------------------------------------
def cnf_kernel(w_ref, ut_ref, b_ref, uw_ref, zt_ref, dzt_ref, dlpt_ref):
    """CNF dynamics for one batch tile (transposed layout, batch = lanes).

    w_ref:    (width, D)   f32   hyper-net W
    ut_ref:   (D, width)   f32   (U * sigmoid(G))^T
    b_ref:    (width, 1)   f32   hyper-net bias B (column)
    uw_ref:   (1, width)   f32   sum_j U[w, j] * W[w, j]  (precomputed per t)
    zt_ref:   (D, Tb)      f32   z^T tile
    dzt_ref:  (D, Tb)      f32   output dz/dt (transposed)
    dlpt_ref: (1, Tb)      f32   output dlogp/dt (transposed)
    """
    width = w_ref.shape[0]
    inv_width = 1.0 / width

    z_t = zt_ref[...]                                                  # (D, Tb)

    # s[w, b] = sum_i W[w, i] * z[b, i] + B[w]
    s = jnp.dot(w_ref[...], z_t, preferred_element_type=jnp.float32) + b_ref[...]
    h = jnp.tanh(s)                                                    # (width, Tb)

    # dz/dt (transposed): (1/width) * U^T @ h
    dzt = jnp.dot(ut_ref[...], h, preferred_element_type=jnp.float32) * inv_width
    dzt_ref[...] = dzt.astype(dzt_ref.dtype)                           # (D, Tb)

    # Analytic Jacobian trace:
    #   trace[b] = (1/width) * sum_w (1 - h[w,b]^2) * sum_j U[w,j] * W[w,j]
    tr = jnp.dot(uw_ref[...], 1.0 - h * h,
                 preferred_element_type=jnp.float32) * inv_width       # (1, Tb)
    dlpt_ref[...] = (-tr).astype(dlpt_ref.dtype)


# ----------------------------------------------------------------------------
# Wrapper: batch-tiled grid, constant index_maps for the t-only weights.
# ----------------------------------------------------------------------------
def cnf_dynamics_pallas(z, W, U, B, *, tile_b=None):
    """z: (batch, D); W,U: (width, D); B: (1, width) -> (dz_dt, dlogp_dt)."""
    batch, d = z.shape
    width = W.shape[0]

    if tile_b is None:
        # Lane-dense tiles: at least 128 lanes, up to 512 for big batches.
        tile_b = min(512, max(128, pl.cdiv(batch, 128) * 128))

    n_tiles = pl.cdiv(batch, tile_b)
    padded = n_tiles * tile_b

    # Transposed, lane-padded inputs; t-only weight prep stays in plain JAX.
    zt = jnp.pad(z.T.astype(jnp.float32), ((0, 0), (0, padded - batch)))
    ut = U.T                                           # (D, width)
    b_col = B.reshape(width, 1)                        # (width, 1)
    uw = jnp.sum(U * W, axis=1).reshape(1, width)      # (1, width)

    const = lambda i: (0, 0)

    dzt, dlpt = pl.pallas_call(
        cnf_kernel,
        out_shape=(
            jax.ShapeDtypeStruct((d, padded), jnp.float32),
            jax.ShapeDtypeStruct((1, padded), jnp.float32),
        ),
        grid_spec=pltpu.PrefetchScalarGridSpec(
            num_scalar_prefetch=0,
            grid=(n_tiles,),
            in_specs=[
                pl.BlockSpec((width, d), const),               # W      (VMEM-resident)
                pl.BlockSpec((d, width), const),               # U^T    (VMEM-resident)
                pl.BlockSpec((width, 1), const),               # B      (VMEM-resident)
                pl.BlockSpec((1, width), const),               # uw     (VMEM-resident)
                pl.BlockSpec((d, tile_b), lambda i: (0, i)),   # z^T tile
            ],
            out_specs=(
                pl.BlockSpec((d, tile_b), lambda i: (0, i)),   # dz^T tile
                pl.BlockSpec((1, tile_b), lambda i: (0, i)),   # dlogp^T tile
            ),
        ),
        compiler_params=pltpu.CompilerParams(
            dimension_semantics=("parallel",),   # v7x: shard tiles across both TCs
        ),
    )(W, ut, b_col, uw, zt)

    dz_dt = dzt[:, :batch].T            # (batch, D)
    dlogp_dt = dlpt[:, :batch].T        # (batch, 1)
    return dz_dt, dlogp_dt


# ----------------------------------------------------------------------------
# Whole forward (hyper-net + dynamics) jitted together => one executable / step.
# ----------------------------------------------------------------------------
@functools.partial(jax.jit, static_argnames=("in_out_dim", "width"))
def _cnf_forward(params, t, z, *, in_out_dim, width):
    w1, b1, w2, b2, w3, b3 = params
    p = jnp.reshape(jnp.asarray(t, jnp.float32), (1, 1))
    p = jnp.tanh(p @ w1.T + b1)
    p = jnp.tanh(p @ w2.T + b2)
    p = (p @ w3.T + b3).reshape(-1)

    bs = width * in_out_dim
    W = p[:bs].reshape(width, in_out_dim)               # torch (width, D, 1) squeezed
    U = p[bs:2 * bs].reshape(width, in_out_dim)         # torch (width, 1, D) squeezed
    G = p[2 * bs:3 * bs].reshape(width, in_out_dim)
    U = U * jax.nn.sigmoid(G)
    B = p[3 * bs:].reshape(1, width)                    # torch (width, 1, 1)

    return cnf_dynamics_pallas(z.astype(jnp.float32), W, U, B)


class CNFPallas:
    """JAX/Pallas port of the PyTorch CNF module (forward pass only)."""

    def __init__(self, in_out_dim, hidden_dim, width, key):
        self.in_out_dim = in_out_dim
        self.hidden_dim = hidden_dim
        self.width = width
        self.blocksize = width * in_out_dim
        out3 = 3 * self.blocksize + width

        k1, k2, k3, k4, k5, k6 = jax.random.split(key, 6)
        scale = 0.1
        # Linear(in, out): weight (out, in), bias (out,)
        self.w1 = scale * jax.random.normal(k1, (hidden_dim, 1), jnp.float32)
        self.b1 = scale * jax.random.normal(k2, (hidden_dim,), jnp.float32)
        self.w2 = scale * jax.random.normal(k3, (hidden_dim, hidden_dim), jnp.float32)
        self.b2 = scale * jax.random.normal(k4, (hidden_dim,), jnp.float32)
        self.w3 = scale * jax.random.normal(k5, (out3, hidden_dim), jnp.float32)
        self.b3 = scale * jax.random.normal(k6, (out3,), jnp.float32)

    @property
    def params(self):
        return (self.w1, self.b1, self.w2, self.b2, self.w3, self.b3)

    def hyper_net(self, t):
        """f(t) -> (W, B, U) exactly as HyperNetwork.forward (used by reference)."""
        p = jnp.reshape(jnp.asarray(t, jnp.float32), (1, 1))
        p = jnp.tanh(p @ self.w1.T + self.b1)
        p = jnp.tanh(p @ self.w2.T + self.b2)
        p = (p @ self.w3.T + self.b3).reshape(-1)
        bs = self.blocksize
        W = p[:bs].reshape(self.width, self.in_out_dim)
        U = p[bs:2 * bs].reshape(self.width, self.in_out_dim)
        G = p[2 * bs:3 * bs].reshape(self.width, self.in_out_dim)
        U = U * jax.nn.sigmoid(G)
        B = p[3 * bs:].reshape(1, self.width)
        return W, B, U

    def forward(self, t, states):
        z, _logp_z = states  # logp_z is threaded through, not used by the dynamics
        return _cnf_forward(self.params, t, z,
                            in_out_dim=self.in_out_dim, width=self.width)


# ----------------------------------------------------------------------------
# Pure-JAX reference (autodiff trace) to validate the analytic-trace kernel.
# ----------------------------------------------------------------------------
def _reference(model, t, z):
    W, B, U = model.hyper_net(t)
    width = model.width

    def dzdt_row(zrow):                  # (D,) -> (D,)
        s = W @ zrow + B[0]              # (width,)
        h = jnp.tanh(s)
        return (h @ U) / width

    dz = jax.vmap(dzdt_row)(z)
    jac = jax.vmap(jax.jacfwd(dzdt_row))(z)              # (batch, D, D)
    tr = jnp.trace(jac, axis1=-2, axis2=-1)[:, None]     # (batch, 1)
    return dz, -tr


if __name__ == "__main__":
    in_out_dim, hidden_dim, width, batch = 2, 32, 16, 8

    key = jax.random.PRNGKey(0)
    k_model, k_z = jax.random.split(key)
    model = CNFPallas(in_out_dim, hidden_dim, width, k_model)

    z = jax.random.normal(k_z, (batch, in_out_dim), jnp.float32)
    logp_z = jnp.zeros((batch, 1), jnp.float32)
    t = jnp.float32(0.5)

    dz_dt, dlogp_z_dt = model.forward(t, (z, logp_z))
    jax.block_until_ready((dz_dt, dlogp_z_dt))

    ref_dz, ref_dlogp = _reference(model, t, z)
    assert dz_dt.shape == (batch, in_out_dim) and dlogp_z_dt.shape == (batch, 1)
    assert jnp.allclose(dz_dt, ref_dz, atol=1e-5, rtol=1e-5)
    assert jnp.allclose(dlogp_z_dt, ref_dlogp, atol=1e-5, rtol=1e-5)

    print("KERNEL_OK")
</pallas_src>

<mosaic_0001>
module attributes {stable_mosaic.version = 11 : i64} {
  func.func @cnf_kernel(%arg0: i32, %arg1: memref<16x2xf32, #tpu.memory_space<vmem>>, %arg2: memref<2x16xf32, #tpu.memory_space<vmem>>, %arg3: memref<16x1xf32, #tpu.memory_space<vmem>>, %arg4: memref<1x16xf32, #tpu.memory_space<vmem>>, %arg5: memref<2x128xf32, #tpu.memory_space<vmem>>, %arg6: memref<2x128xf32, #tpu.memory_space<vmem>>, %arg7: memref<1x128xf32, #tpu.memory_space<vmem>>) attributes {dimension_semantics = [#tpu.dimension_semantics<parallel>], iteration_bounds = array<i64: 1>, scalar_prefetch = 0 : i64, scratch_operands = 0 : i64, tpu.core_type = #tpu.core_type<tc>, window_params = [{pipeline_mode = #tpu.pipeline_mode<synchronous>, transform_indices = @transform_0, window_bounds = array<i64: 16, 2>}, {pipeline_mode = #tpu.pipeline_mode<synchronous>, transform_indices = @transform_1, window_bounds = array<i64: 2, 16>}, {pipeline_mode = #tpu.pipeline_mode<synchronous>, transform_indices = @transform_2, window_bounds = array<i64: 16, 1>}, {pipeline_mode = #tpu.pipeline_mode<synchronous>, transform_indices = @transform_3, window_bounds = array<i64: 1, 16>}, {transform_indices = @transform_4, window_bounds = array<i64: 2, 128>}, {transform_indices = @transform_5, window_bounds = array<i64: 2, 128>}, {transform_indices = @transform_6, window_bounds = array<i64: 1, 128>}]} {
    %c0 = arith.constant 0 : index
    %c0_0 = arith.constant 0 : index
    %0 = vector.load %arg5[%c0, %c0_0] : memref<2x128xf32, #tpu.memory_space<vmem>>, vector<2x128xf32>
    %c0_1 = arith.constant 0 : index
    %c0_2 = arith.constant 0 : index
    %1 = vector.load %arg1[%c0_1, %c0_2] : memref<16x2xf32, #tpu.memory_space<vmem>>, vector<16x2xf32>
    %cst = arith.constant dense<0.000000e+00> : vector<16x128xf32>
    %2 = tpu.matmul %1, %0, %cst {dimension_numbers = #tpu.dot_dimension_numbers<[1], [0], [0], [1], [0, 0, 1, 1], [], []>} : vector<16x2xf32>, vector<2x128xf32>, vector<16x128xf32> -> vector<16x128xf32>
    %c0_3 = arith.constant 0 : index
    %c0_4 = arith.constant 0 : index
    %3 = vector.load %arg3[%c0_3, %c0_4] : memref<16x1xf32, #tpu.memory_space<vmem>>, vector<16x1xf32>
    %4 = vector.broadcast %3 : vector<16x1xf32> to vector<16x128xf32>
    %5 = arith.addf %2, %4 : vector<16x128xf32>
    %6 = math.tanh %5 : vector<16x128xf32>
    %c0_5 = arith.constant 0 : index
    %c0_6 = arith.constant 0 : index
    %7 = vector.load %arg2[%c0_5, %c0_6] : memref<2x16xf32, #tpu.memory_space<vmem>>, vector<2x16xf32>
    %cst_7 = arith.constant dense<0.000000e+00> : vector<2x128xf32>
    %8 = tpu.matmul %7, %6, %cst_7 {dimension_numbers = #tpu.dot_dimension_numbers<[1], [0], [0], [1], [0, 0, 1, 1], [], []>} : vector<2x16xf32>, vector<16x128xf32>, vector<2x128xf32> -> vector<2x128xf32>
    %cst_8 = arith.constant 6.250000e-02 : f32
    %9 = vector.broadcast %cst_8 : f32 to vector<2x128xf32>
    %10 = arith.mulf %8, %9 : vector<2x128xf32>
    %c0_9 = arith.constant 0 : index
    %c0_10 = arith.constant 0 : index
    %11 = vector.load %arg6[%c0_9, %c0_10] : memref<2x128xf32, #tpu.memory_space<vmem>>, vector<2x128xf32>
    tpu.vector_store %arg6[%c0_9, %c0_10], %10 {strides = array<i32>} : memref<2x128xf32, #tpu.memory_space<vmem>>, vector<2x128xf32>,
    %c0_11 = arith.constant 0 : index
    %c0_12 = arith.constant 0 : index
    %12 = vector.load %arg4[%c0_11, %c0_12] : memref<1x16xf32, #tpu.memory_space<vmem>>, vector<1x16xf32>
    %13 = arith.mulf %6, %6 : vector<16x128xf32>
    %cst_13 = arith.constant 1.000000e+00 : f32
    %14 = vector.broadcast %cst_13 : f32 to vector<16x128xf32>
    %15 = arith.subf %14, %13 : vector<16x128xf32>
    %cst_14 = arith.constant dense<0.000000e+00> : vector<1x128xf32>
    %16 = tpu.matmul %12, %15, %cst_14 {dimension_numbers = #tpu.dot_dimension_numbers<[1], [0], [0], [1], [0, 0, 1, 1], [], []>} : vector<1x16xf32>, vector<16x128xf32>, vector<1x128xf32> -> vector<1x128xf32>
    %cst_15 = arith.constant 6.250000e-02 : f32
    %17 = vector.broadcast %cst_15 : f32 to vector<1x128xf32>
    %18 = arith.mulf %16, %17 : vector<1x128xf32>
    %cst_16 = arith.constant 0.000000e+00 : f32
    %19 = vector.broadcast %cst_16 : f32 to vector<1x128xf32>
    %20 = arith.subf %19, %18 : vector<1x128xf32>
    %c0_17 = arith.constant 0 : index
    %c0_18 = arith.constant 0 : index
    %21 = vector.load %arg7[%c0_17, %c0_18] : memref<1x128xf32, #tpu.memory_space<vmem>>, vector<1x128xf32>
    tpu.vector_store %arg7[%c0_17, %c0_18], %20 {strides = array<i32>} : memref<1x128xf32, #tpu.memory_space<vmem>>, vector<1x128xf32>,
    return
  }
  func.func @transform_0(%arg0: i32) -> (i32, i32) {
    %c0_i32 = arith.constant 0 : i32
    %c0_i32_0 = arith.constant 0 : i32
    %c0_i32_1 = arith.constant 0 : i32
    return %c0_i32, %c0_i32_0 : i32, i32
  }
  func.func @transform_1(%arg0: i32) -> (i32, i32) {
    %c0_i32 = arith.constant 0 : i32
    %c0_i32_0 = arith.constant 0 : i32
    %c0_i32_1 = arith.constant 0 : i32
    return %c0_i32, %c0_i32_0 : i32, i32
  }
  func.func @transform_2(%arg0: i32) -> (i32, i32) {
    %c0_i32 = arith.constant 0 : i32
    %c0_i32_0 = arith.constant 0 : i32
    %c0_i32_1 = arith.constant 0 : i32
    return %c0_i32, %c0_i32_0 : i32, i32
  }
  func.func @transform_3(%arg0: i32) -> (i32, i32) {
    %c0_i32 = arith.constant 0 : i32
    %c0_i32_0 = arith.constant 0 : i32
    %c0_i32_1 = arith.constant 0 : i32
    return %c0_i32, %c0_i32_0 : i32, i32
  }
  func.func @transform_4(%arg0: i32) -> (i32, i32) {
    %c0_i32 = arith.constant 0 : i32
    %c0_i32_0 = arith.constant 0 : i32
    return %c0_i32, %arg0 : i32, i32
  }
  func.func @transform_5(%arg0: i32) -> (i32, i32) {
    %c0_i32 = arith.constant 0 : i32
    %c0_i32_0 = arith.constant 0 : i32
    return %c0_i32, %arg0 : i32, i32
  }
  func.func @transform_6(%arg0: i32) -> (i32, i32) {
    %c0_i32 = arith.constant 0 : i32
    %c0_i32_0 = arith.constant 0 : i32
    return %c0_i32, %arg0 : i32, i32
  }
}

</mosaic_0001>

<llo_original>
// kernel: _cnf_forward.1
$region0: #{_cnf_forward.1}
  #allocation0 [shape = 'u32[]', space=smem, size = 0x4, offset = 0x4, fixed_abs, tag = 'smem constant byte address 0x4 - core index']
  #allocation1 [shape = 'u32[144,128]{1,0:T(1,128)}', space=vmem, size = 0x12000, scoped, tag = 'internal scratch']
  %s0 = inlined_call_operand.vmem [shape: f32[16,2], index: 0, kind: input, shape index: {}]
  %s1 = inlined_call_operand.vmem [shape: f32[2,16], index: 1, kind: input, shape index: {}]
  %s2 = inlined_call_operand.vmem [shape: f32[16,1], index: 2, kind: input, shape index: {}]
  %s3 = inlined_call_operand.vmem [shape: f32[1,16], index: 3, kind: input, shape index: {}]
  %s4 = inlined_call_operand.vmem [shape: f32[2,128], index: 4, kind: input, shape index: {}]
  %s5 = inlined_call_operand.vmem [shape: f32[2,128], index: 5, kind: output, shape index: {0}]
  %s6 = inlined_call_operand.vmem [shape: f32[1,128], index: 6, kind: output, shape index: {1}]
  %7 = xla_tuple %s5, %s6
  %s8 = sld [smem:[#allocation0]]
  $region38: #{_cnf_forward.1} parent=0
    _
  %s10 = ssub.s32 1, %s8
  %s11 = scalar_select 0, %s10, %s8
  // Predicated region
  $region2: #{_cnf_forward.1} parent=0 // pred_check
    _
  $region3: #{_cnf_forward.1} parent=0 // pred_check_branch
    %13 = sbr.rel (0) target = $region5
  $region4: #{_cnf_forward.1} parent=0 // pred_region
    _
  $region5: #{_cnf_forward.1} parent=0 // pred_fallthru
    _
  // Predicated region
  $region6: #{_cnf_forward.1} parent=0 // pred_check
    _
  $region7: #{_cnf_forward.1} parent=0 // pred_check_branch
    %15 = sbr.rel (0) target = $region9
  $region8: #{_cnf_forward.1} parent=0 // pred_region
    _
  $region9: #{_cnf_forward.1} parent=0 // pred_fallthru
    _
  // Predicated region
  $region10: #{_cnf_forward.1} parent=0 // pred_check
    _
  $region11: #{_cnf_forward.1} parent=0 // pred_check_branch
    %17 = sbr.rel (0) target = $region13
  $region12: #{_cnf_forward.1} parent=0 // pred_region
    _
  $region13: #{_cnf_forward.1} parent=0 // pred_fallthru
    _
  // Predicated region
  $region14: #{_cnf_forward.1} parent=0 // pred_check
    _
  $region15: #{_cnf_forward.1} parent=0 // pred_check_branch
    %19 = sbr.rel (0) target = $region17
  $region16: #{_cnf_forward.1} parent=0 // pred_region
    _
  $region17: #{_cnf_forward.1} parent=0 // pred_fallthru
    _
  // Predicated region
  $region18: #{_cnf_forward.1} parent=0 // pred_check
    _
  $region19: #{_cnf_forward.1} parent=0 // pred_check_branch
    %21 = sbr.rel (0) target = $region21
  $region20: #{_cnf_forward.1} parent=0 // pred_region
    _
  $region21: #{_cnf_forward.1} parent=0 // pred_fallthru
    _
  %v22 = vld [vmem:[%s4] sm:$0x3]
  %v23 = vld [vmem:[%s0] sm:$0xff]
  %v24 = vld [vmem:[%s0 + $0x8] sm:$0xff]
  %v25 = vld [vmem:[%s2] sm:$0xff]
  %v26 = vld [vmem:[%s2 + $0x8] sm:$0xff]
  %28 = vset.pattern.permute.xlu0 0
  %29 = vperm.xlu0 %28, %v25
  %v30 = vpop.permute.xlu0 %29
  %33 = vset.pattern.permute.xlu0 0
  %34 = vperm.xlu0 %33, %v26
  %v35 = vpop.permute.xlu0 %34
  %vm37 = vcmask 15360
  %v39 = vsel %vm37, %v23, 0
  %v42 = vsel %vm37, %v24, 0
  %vm44 = vcmask 1041408
  %v46 = vsel %vm44, %v22, 0
  %48 = vmatprep.subr.mxu0 0.0
  %49 = vmatpush1.msra.mxu0 %v46
  %50 = vmatprep.subr.mxu0 0.0
  %51 = vmatpush1.msra.mxu0 0.0
  %52 = vmatprep.subr.mxu0 0.0
  %53 = vmatpush1.msra.mxu0 0.0
  %54 = vmatprep.subr.mxu0 0.0
  %55 = vmatpush1.msra.mxu0 0.0
  %56 = vmatprep.subr.mxu0 0.0
  %57 = vmatpush1.msra.mxu0 0.0
  %58 = vmatprep.subr.mxu0 0.0
  %59 = vmatpush1.msra.mxu0 0.0
  %60 = vmatprep.subr.mxu0 0.0
  %61 = vmatpush1.msra.mxu0 0.0
  %62 = vmatprep.subr.mxu0 0.0
  %63 = vmatpush1.msra.mxu0 0.0
  %64 = vmatprep.subr.mxu0 0.0
  %65 = vmatpush1.msra.mxu0 0.0
  %66 = vmatprep.subr.mxu0 0.0
  %67 = vmatpush1.msra.mxu0 0.0
  %68 = vmatprep.subr.mxu0 0.0
  %69 = vmatpush1.msra.mxu0 0.0
  %70 = vmatprep.subr.mxu0 0.0
  %71 = vmatpush1.msra.mxu0 0.0
  %72 = vmatprep.subr.mxu0 0.0
  %73 = vmatpush1.msra.mxu0 0.0
  %74 = vmatprep.subr.mxu0 0.0
  %75 = vmatpush1.msra.mxu0 0.0
  %76 = vmatprep.subr.mxu0 0.0
  %77 = vmatpush1.msra.mxu0 0.0
  %78 = vmatprep.subr.mxu0 0.0
  %79 = vmatpush1.msra.mxu0 0.0
  %80 = vmatprep.subr.mxu0 0.0
  %81 = vmatpush1.msra.mxu0 0.0
  %82 = vmatprep.subr.mxu0 0.0
  %83 = vmatpush1.msra.mxu0 0.0
  %84 = vmatprep.subr.mxu0 0.0
  %85 = vmatpush1.msra.mxu0 0.0
  %86 = vmatprep.subr.mxu0 0.0
  %87 = vmatpush1.msra.mxu0 0.0
  %88 = vmatprep.subr.mxu0 0.0
  %89 = vmatpush1.msra.mxu0 0.0
  %90 = vmatprep.subr.mxu0 0.0
  %91 = vmatpush1.msra.mxu0 0.0
  %92 = vmatprep.subr.mxu0 0.0
  %93 = vmatpush1.msra.mxu0 0.0
  %94 = vmatprep.subr.mxu0 0.0
  %95 = vmatpush1.msra.mxu0 0.0
  %96 = vmatprep.subr.mxu0 0.0
  %97 = vmatpush1.msra.mxu0 0.0
  %98 = vmatprep.subr.mxu0 0.0
  %99 = vmatpush1.msra.mxu0 0.0
  %100 = vmatprep.subr.mxu0 0.0
  %101 = vmatpush1.msra.mxu0 0.0
  %102 = vmatprep.subr.mxu0 0.0
  %103 = vmatpush1.msra.mxu0 0.0
  %104 = vmatprep.subr.mxu0 0.0
  %105 = vmatpush1.msra.mxu0 0.0
  %106 = vmatprep.subr.mxu0 0.0
  %107 = vmatpush1.msra.mxu0 0.0
  %108 = vmatprep.subr.mxu0 0.0
  %109 = vmatpush1.msra.mxu0 0.0
  %110 = vmatprep.subr.mxu0 0.0
  %111 = vmatpush1.msra.mxu0 0.0
  %112 = vmatprep.mubr.f32.mxu0 0.0
  %113 = vmatmul.mubr.f32.gmra.mrb[0].mxu0 %v39
  %v114 = vpop.f32.mrb[0].mxu0
  %v115 = vadd.f32 %v30, %v114
  %v116 = vpop.f32.mrb[0].mxu0
  %117 = vmatprep.mubr.f32.mxu0 0.0
  %118 = vmatmul.mubr.f32.gmra.mrb[0].mxu0 %v42
  %v119 = vpop.f32.mrb[0].mxu0
  %v120 = vadd.f32 %v35, %v119
  %v121 = vpop.f32.mrb[0].mxu0
  %122 = vdwg.mxu0
  %v123 = vtanh.pop %v115
  %v124 = vtanh.pop %v120
  %v125 = vld [vmem:[%s1] sm:$0x3]
  %vm126 = vcmask 130048
  %v128 = vsel %vm126, %v125, 0
  %130 = vmatprep.subr.mxu0 0.0
  %131 = vmatpush1.msra.mxu0 %v123
  %132 = vmatprep.subr.mxu0 0.0
  %133 = vmatpush1.msra.mxu0 %v124
  %134 = vmatprep.subr.mxu0 0.0
  %135 = vmatpush1.msra.mxu0 0.0
  %136 = vmatprep.subr.mxu0 0.0
  %137 = vmatpush1.msra.mxu0 0.0
  %138 = vmatprep.subr.mxu0 0.0
  %139 = vmatpush1.msra.mxu0 0.0
  %140 = vmatprep.subr.mxu0 0.0
  %141 = vmatpush1.msra.mxu0 0.0
  %142 = vmatprep.subr.mxu0 0.0
  %143 = vmatpush1.msra.mxu0 0.0
  %144 = vmatprep.subr.mxu0 0.0
  %145 = vmatpush1.msra.mxu0 0.0
  %146 = vmatprep.subr.mxu0 0.0
  %147 = vmatpush1.msra.mxu0 0.0
  %148 = vmatprep.subr.mxu0 0.0
  %149 = vmatpush1.msra.mxu0 0.0
  %150 = vmatprep.subr.mxu0 0.0
  %151 = vmatpush1.msra.mxu0 0.0
  %152 = vmatprep.subr.mxu0 0.0
  %153 = vmatpush1.msra.mxu0 0.0
  %154 = vmatprep.subr.mxu0 0.0
  %155 = vmatpush1.msra.mxu0 0.0
  %156 = vmatprep.subr.mxu0 0.0
  %157 = vmatpush1.msra.mxu0 0.0
  %158 = vmatprep.subr.mxu0 0.0
  %159 = vmatpush1.msra.mxu0 0.0
  %160 = vmatprep.subr.mxu0 0.0
  %161 = vmatpush1.msra.mxu0 0.0
  %162 = vmatprep.subr.mxu0 0.0
  %163 = vmatpush1.msra.mxu0 0.0
  %164 = vmatprep.subr.mxu0 0.0
  %165 = vmatpush1.msra.mxu0 0.0
  %166 = vmatprep.subr.mxu0 0.0
  %167 = vmatpush1.msra.mxu0 0.0
  %168 = vmatprep.subr.mxu0 0.0
  %169 = vmatpush1.msra.mxu0 0.0
  %170 = vmatprep.subr.mxu0 0.0
  %171 = vmatpush1.msra.mxu0 0.0
  %172 = vmatprep.subr.mxu0 0.0
  %173 = vmatpush1.msra.mxu0 0.0
  %174 = vmatprep.subr.mxu0 0.0
  %175 = vmatpush1.msra.mxu0 0.0
  %176 = vmatprep.subr.mxu0 0.0
  %177 = vmatpush1.msra.mxu0 0.0
  %178 = vmatprep.subr.mxu0 0.0
  %179 = vmatpush1.msra.mxu0 0.0
  %180 = vmatprep.subr.mxu0 0.0
  %181 = vmatpush1.msra.mxu0 0.0
  %182 = vmatprep.subr.mxu0 0.0
  %183 = vmatpush1.msra.mxu0 0.0
  %184 = vmatprep.subr.mxu0 0.0
  %185 = vmatpush1.msra.mxu0 0.0
  %186 = vmatprep.subr.mxu0 0.0
  %187 = vmatpush1.msra.mxu0 0.0
  %188 = vmatprep.subr.mxu0 0.0
  %189 = vmatpush1.msra.mxu0 0.0
  %190 = vmatprep.subr.mxu0 0.0
  %191 = vmatpush1.msra.mxu0 0.0
  %192 = vmatprep.subr.mxu0 0.0
  %193 = vmatpush1.msra.mxu0 0.0
  %194 = vmatprep.mubr.f32.mxu0 0.0
  %195 = vmatmul.mubr.f32.gmra.mrb[0].mxu0 %v128
  %v196 = vpop.f32.mrb[0].mxu0
  %v197 = vadd.f32 0.0, %v196
  %v198 = vpop.f32.mrb[0].mxu0
  %199 = vdwg.mxu0
  %v200 = vmul.f32 %v197, 0.0625
  %201 = vst [vmem:[%s5] sm:$0x3] %v200
  %v202 = vld [vmem:[%s3] sm:$0x1]
  %v203 = vmul.f32 %v123, %v123
  %v204 = vmul.f32 %v124, %v124
  %v205 = vsub.f32 1.0, %v203
  %v206 = vsub.f32 1.0, %v204
  %v208 = vsel %vm126, %v202, 0
  %210 = vmatprep.subr.mxu0 0.0
  %211 = vmatpush1.msra.mxu0 %v205
  %212 = vmatprep.subr.mxu0 0.0
  %213 = vmatpush1.msra.mxu0 %v206
  %214 = vmatprep.subr.mxu0 0.0
  %215 = vmatpush1.msra.mxu0 0.0
  %216 = vmatprep.subr.mxu0 0.0
  %217 = vmatpush1.msra.mxu0 0.0
  %218 = vmatprep.subr.mxu0 0.0
  %219 = vmatpush1.msra.mxu0 0.0
  %220 = vmatprep.subr.mxu0 0.0
  %221 = vmatpush1.msra.mxu0 0.0
  %222 = vmatprep.subr.mxu0 0.0
  %223 = vmatpush1.msra.mxu0 0.0
  %224 = vmatprep.subr.mxu0 0.0
  %225 = vmatpush1.msra.mxu0 0.0
  %226 = vmatprep.subr.mxu0 0.0
  %227 = vmatpush1.msra.mxu0 0.0
  %228 = vmatprep.subr.mxu0 0.0
  %229 = vmatpush1.msra.mxu0 0.0
  %230 = vmatprep.subr.mxu0 0.0
  %231 = vmatpush1.msra.mxu0 0.0
  %232 = vmatprep.subr.mxu0 0.0
  %233 = vmatpush1.msra.mxu0 0.0
  %234 = vmatprep.subr.mxu0 0.0
  %235 = vmatpush1.msra.mxu0 0.0
  %236 = vmatprep.subr.mxu0 0.0
  %237 = vmatpush1.msra.mxu0 0.0
  %238 = vmatprep.subr.mxu0 0.0
  %239 = vmatpush1.msra.mxu0 0.0
  %240 = vmatprep.subr.mxu0 0.0
  %241 = vmatpush1.msra.mxu0 0.0
  %242 = vmatprep.subr.mxu0 0.0
  %243 = vmatpush1.msra.mxu0 0.0
  %244 = vmatprep.subr.mxu0 0.0
  %245 = vmatpush1.msra.mxu0 0.0
  %246 = vmatprep.subr.mxu0 0.0
  %247 = vmatpush1.msra.mxu0 0.0
  %248 = vmatprep.subr.mxu0 0.0
  %249 = vmatpush1.msra.mxu0 0.0
  %250 = vmatprep.subr.mxu0 0.0
  %251 = vmatpush1.msra.mxu0 0.0
  %252 = vmatprep.subr.mxu0 0.0
  %253 = vmatpush1.msra.mxu0 0.0
  %254 = vmatprep.subr.mxu0 0.0
  %255 = vmatpush1.msra.mxu0 0.0
  %256 = vmatprep.subr.mxu0 0.0
  %257 = vmatpush1.msra.mxu0 0.0
  %258 = vmatprep.subr.mxu0 0.0
  %259 = vmatpush1.msra.mxu0 0.0
  %260 = vmatprep.subr.mxu0 0.0
  %261 = vmatpush1.msra.mxu0 0.0
  %262 = vmatprep.subr.mxu0 0.0
  %263 = vmatpush1.msra.mxu0 0.0
  %264 = vmatprep.subr.mxu0 0.0
  %265 = vmatpush1.msra.mxu0 0.0
  %266 = vmatprep.subr.mxu0 0.0
  %267 = vmatpush1.msra.mxu0 0.0
  %268 = vmatprep.subr.mxu0 0.0
  %269 = vmatpush1.msra.mxu0 0.0
  %270 = vmatprep.subr.mxu0 0.0
  %271 = vmatpush1.msra.mxu0 0.0
  %272 = vmatprep.subr.mxu0 0.0
  %273 = vmatpush1.msra.mxu0 0.0
  %274 = vmatprep.mubr.f32.mxu0 0.0
  %275 = vmatmul.mubr.f32.gmra.mrb[0].mxu0 %v208
  %v276 = vpop.f32.mrb[0].mxu0
  %v277 = vadd.f32 0.0, %v276
  %v278 = vpop.f32.mrb[0].mxu0
  %279 = vdwg.mxu0
  %v280 = vmul.f32 %v277, 0.0625
  %v281 = vsub.f32 0.0, %v280
  %282 = vst [vmem:[%s6] sm:$0x1] %v281
  // Predicated region
  $region22: #{_cnf_forward.1} parent=0 // pred_check
    _
  $region23: #{_cnf_forward.1} parent=0 // pred_check_branch
    %284 = sbr.rel (0) target = $region25
  $region24: #{_cnf_forward.1} parent=0 // pred_region
    _
  $region25: #{_cnf_forward.1} parent=0 // pred_fallthru
    _
  // Predicated region
  $region26: #{_cnf_forward.1} parent=0 // pred_check
    _
  $region27: #{_cnf_forward.1} parent=0 // pred_check_branch
    %286 = sbr.rel (0) target = $region29
  $region28: #{_cnf_forward.1} parent=0 // pred_region
    _
  $region29: #{_cnf_forward.1} parent=0 // pred_fallthru
    _
  // Predicated region
  $region30: #{_cnf_forward.1} parent=0 // pred_check
    _
  $region31: #{_cnf_forward.1} parent=0 // pred_check_branch
    %288 = sbr.rel (0) target = $region33
  $region32: #{_cnf_forward.1} parent=0 // pred_region
    _
  $region33: #{_cnf_forward.1} parent=0 // pred_fallthru
    _
  // Predicated region
  $region34: #{_cnf_forward.1} parent=0 // pred_check
    _
  $region35: #{_cnf_forward.1} parent=0 // pred_check_branch
    %290 = sbr.rel (0) target = $region37
  $region36: #{_cnf_forward.1} parent=0 // pred_region
    _
  $region37: #{_cnf_forward.1} parent=0 // pred_fallthru
    _

</llo_original>
